<compile_context>
chip_gen: v7x
topology: tpu7x:2x2x1
jax: 0.10.0
libtpu: 0.0.40
codegen_flags: <defaults>
</compile_context>

<pallas_src>
import functools
import math

import jax
import jax.numpy as jnp
from jax.experimental import pallas as pl
from jax.experimental.pallas import tpu as pltpu

_LANES = 128
_BLOCK_BYTES = 2 * 1024 * 1024                      # per-input block byte budget
_BLOCK_ROWS = _BLOCK_BYTES // (_LANES * 4)          # 4096 rows for f32 blocks
_ACC_ROWS = 256                                     # fixed-size VMEM accumulator
_VMEM_LIMIT = 16 * 1024 * 1024                      # >> actual use (~8.3 MiB max)
_PALLAS_MIN_ELEMS = 1 << 16                         # below ~64K elems use plain jnp

assert _BLOCK_ROWS % _ACC_ROWS == 0


# ---------------------------------------------------------------------------
# Pallas kernels: grid-accumulated scalar reductions.
# ---------------------------------------------------------------------------
def _make_sum_log_kernel(rows, block_rows, acc_rows):
    n_chunks = block_rows // acc_rows
    ragged = (rows % block_rows) != 0  # trace-time constant

    def accumulate(x_ref, acc_ref, i, masked):
        if masked:
            base = (jax.lax.broadcasted_iota(jnp.int32, (acc_rows, _LANES), 0)
                    + i * block_rows)
        partial = None
        for k in range(n_chunks):
            x = x_ref[pl.ds(k * acc_rows, acc_rows), :].astype(jnp.float32)
            if masked:
                # Mask BEFORE the log: garbage rows of the edge block must not
                # produce NaN/Inf that would leak through jnp.where.
                x = jnp.where(base + k * acc_rows < rows, x, 1.0)
            v = jnp.log(x)
            partial = v if partial is None else partial + v
        acc_ref[...] += partial

    def kernel(x_ref, o_ref, acc_ref):
        i = pl.program_id(0)
        last = pl.num_programs(0) - 1

        @pl.when(i == 0)
        def _():
            acc_ref[...] = jnp.zeros_like(acc_ref)

        if ragged:
            @pl.when(i != last)
            def _():
                accumulate(x_ref, acc_ref, i, masked=False)

            @pl.when(i == last)
            def _():
                accumulate(x_ref, acc_ref, i, masked=True)
        else:
            accumulate(x_ref, acc_ref, i, masked=False)

        @pl.when(i == last)
        def _():
            o_ref[...] = jnp.sum(acc_ref[...], keepdims=True)

    return kernel


def _make_sum_sq_diff_kernel(rows, block_rows, acc_rows):
    n_chunks = block_rows // acc_rows
    ragged = (rows % block_rows) != 0  # trace-time constant

    def accumulate(a_ref, b_ref, acc_ref, i, masked):
        if masked:
            base = (jax.lax.broadcasted_iota(jnp.int32, (acc_rows, _LANES), 0)
                    + i * block_rows)
        partial = None
        for k in range(n_chunks):
            a = a_ref[pl.ds(k * acc_rows, acc_rows), :].astype(jnp.float32)
            b = b_ref[pl.ds(k * acc_rows, acc_rows), :].astype(jnp.float32)
            d = a - b
            if masked:
                d = jnp.where(base + k * acc_rows < rows, d, 0.0)
            v = d * d
            partial = v if partial is None else partial + v
        acc_ref[...] += partial

    def kernel(a_ref, b_ref, o_ref, acc_ref):
        i = pl.program_id(0)
        last = pl.num_programs(0) - 1

        @pl.when(i == 0)
        def _():
            acc_ref[...] = jnp.zeros_like(acc_ref)

        if ragged:
            @pl.when(i != last)
            def _():
                accumulate(a_ref, b_ref, acc_ref, i, masked=False)

            @pl.when(i == last)
            def _():
                accumulate(a_ref, b_ref, acc_ref, i, masked=True)
        else:
            accumulate(a_ref, b_ref, acc_ref, i, masked=False)

        @pl.when(i == last)
        def _():
            o_ref[...] = jnp.sum(acc_ref[...], keepdims=True)

    return kernel


# ---------------------------------------------------------------------------
# Glue: lane-dense (rows, 128) view (copy-free whenever size % 128 == 0)
# ---------------------------------------------------------------------------
def _to_slab(x, pad_value):
    """View x as (rows, 128); pads only the tail (and only if needed)."""
    flat = jnp.reshape(x, (-1,))
    n = flat.shape[0]
    rem = n % _LANES
    if rem:
        flat = jnp.pad(flat, (0, _LANES - rem), constant_values=pad_value)
    rows = flat.shape[0] // _LANES
    return flat.reshape(rows, _LANES), rows


def _block_config(rows):
    if rows >= _BLOCK_ROWS:
        return _BLOCK_ROWS, _ACC_ROWS
    # Small input: single full-extent block; the accumulator IS the block.
    return rows, rows


def _reduction_grid_spec(rows, block_rows, acc_rows, num_inputs):
    grid = (pl.cdiv(rows, block_rows),)
    in_spec = pl.BlockSpec((block_rows, _LANES), lambda i: (i, 0))
    return pltpu.PrefetchScalarGridSpec(
        num_scalar_prefetch=0,
        grid=grid,
        in_specs=[in_spec] * num_inputs,
        out_specs=pl.BlockSpec((1, 1), lambda i: (0, 0)),
        scratch_shapes=[pltpu.VMEM((acc_rows, _LANES), jnp.float32)],
    )


def _sum_log_pallas(x):
    slab, rows = _to_slab(x, pad_value=1.0)  # log(1) = 0 -> neutral padding
    block_rows, acc_rows = _block_config(rows)
    n = rows * _LANES
    cost = pl.CostEstimate(
        flops=int(n),
        transcendentals=int(n),
        bytes_accessed=int(n * slab.dtype.itemsize + 4),
    )
    out = pl.pallas_call(
        _make_sum_log_kernel(rows, block_rows, acc_rows),
        out_shape=jax.ShapeDtypeStruct((1, 1), jnp.float32),
        grid_spec=_reduction_grid_spec(rows, block_rows, acc_rows, num_inputs=1),
        compiler_params=pltpu.CompilerParams(
            dimension_semantics=("arbitrary",),
            vmem_limit_bytes=_VMEM_LIMIT),
        cost_estimate=cost,
    )(slab)
    return out[0, 0]


def _sum_sq_diff_pallas(a, b):
    sa, rows = _to_slab(a, pad_value=0.0)  # 0 - 0 -> neutral padding
    sb, _ = _to_slab(b, pad_value=0.0)
    block_rows, acc_rows = _block_config(rows)
    n = rows * _LANES
    cost = pl.CostEstimate(
        flops=int(3 * n),
        transcendentals=0,
        bytes_accessed=int(n * (sa.dtype.itemsize + sb.dtype.itemsize) + 4),
    )
    out = pl.pallas_call(
        _make_sum_sq_diff_kernel(rows, block_rows, acc_rows),
        out_shape=jax.ShapeDtypeStruct((1, 1), jnp.float32),
        grid_spec=_reduction_grid_spec(rows, block_rows, acc_rows, num_inputs=2),
        compiler_params=pltpu.CompilerParams(
            dimension_semantics=("arbitrary",),
            vmem_limit_bytes=_VMEM_LIMIT),
        cost_estimate=cost,
    )(sa, sb)
    return out[0, 0]


# ---------------------------------------------------------------------------
# RateDistortionLoss forward (default config: mse metric, no log-variance)
# ---------------------------------------------------------------------------
def rate_distortion_loss(output, target, lmbda=0.01, bpp_weight=0.01,
                         *, min_pallas_elements=_PALLAS_MIN_ELEMS):
    """output: {'x_hat': [N,C,H,W], 'likelihoods': {name: array}}; target: [N,C,H,W]."""
    N, _, H, W = target.shape
    num_pixels = N * H * W

    def sum_log(x):
        if x.size < min_pallas_elements:   # tiny-tensor fallback (static)
            return jnp.sum(jnp.log(x.astype(jnp.float32)))
        return _sum_log_pallas(x)

    def sum_sq_diff(a, b):
        if a.size < min_pallas_elements:   # tiny-tensor fallback (static)
            d = a.astype(jnp.float32) - b.astype(jnp.float32)
            return jnp.sum(d * d)
        return _sum_sq_diff_pallas(a, b)

    # Per-tensor log reductions (no concatenate -> no extra HBM round trip).
    # Note: matches PyTorch exactly -> log(0) would give -inf (no clamping).
    log_sum = sum(sum_log(l) for l in output["likelihoods"].values())
    bpp_loss = bpp_weight * (log_sum / (-math.log(2) * num_pixels))

    # nn.MSELoss() == mean of squared error over ALL elements.
    sq_sum = sum_sq_diff(output["x_hat"], target)
    mse_loss = lmbda * (sq_sum / jnp.float32(target.size))

    return {"bpp_loss": bpp_loss, "mse_loss": mse_loss}


if __name__ == "__main__":
    import numpy as np

    key = jax.random.PRNGKey(0)
    k1, k2, k3, k4, k5, k6 = jax.random.split(key, 6)

    N, C, H, W = 2, 4, 16, 16
    target = jax.random.uniform(k1, (N, C, H, W), dtype=jnp.float32)
    x_hat = jax.random.uniform(k2, (N, C, H, W), dtype=jnp.float32)
    lik_y = jax.random.uniform(k3, (N, 8, H // 4, W // 4), dtype=jnp.float32,
                               minval=0.05, maxval=1.0)
    lik_z = jax.random.uniform(k4, (N, 4, H // 8, W // 8), dtype=jnp.float32,
                               minval=0.05, maxval=1.0)

    output = {"x_hat": x_hat, "likelihoods": {"y": lik_y, "z": lik_z}}

    # Force the Pallas path even at demo-sized inputs (single jitted dispatch).
    loss_fn = jax.jit(functools.partial(rate_distortion_loss, min_pallas_elements=0))
    out = loss_fn(output, target)
    jax.block_until_ready(out)

    # Pure-JAX reference check (per-tensor, like the PyTorch module).
    num_pixels = N * H * W
    ref_bpp = 0.01 * (
        jnp.sum(jnp.log(lik_y)) / (-math.log(2) * num_pixels)
        + jnp.sum(jnp.log(lik_z)) / (-math.log(2) * num_pixels)
    )
    ref_mse = 0.01 * jnp.mean((x_hat - target) ** 2)
    assert jnp.allclose(out["bpp_loss"], ref_bpp, rtol=1e-5, atol=1e-6)
    assert jnp.allclose(out["mse_loss"], ref_mse, rtol=1e-5, atol=1e-6)

    # Default-threshold path (small-size fallback) must agree with Pallas path.
    out_fb = jax.jit(rate_distortion_loss)(output, target)
    assert jnp.allclose(out_fb["bpp_loss"], out["bpp_loss"], rtol=1e-5, atol=1e-6)
    assert jnp.allclose(out_fb["mse_loss"], out["mse_loss"], rtol=1e-5, atol=1e-6)

    # Multi-block + ragged-edge + tail-padding path check on a larger vector.
    n_big = _BLOCK_ROWS * _LANES + 1000          # -> 2 grid steps, ragged last block
    big_a = jax.random.uniform(k5, (n_big,), dtype=jnp.float32,
                               minval=0.05, maxval=1.0)
    big_b = jax.random.uniform(k6, (n_big,), dtype=jnp.float32,
                               minval=0.05, maxval=1.0)
    got_log = jax.block_until_ready(jax.jit(_sum_log_pallas)(big_a))
    got_sq = jax.block_until_ready(jax.jit(_sum_sq_diff_pallas)(big_a, big_b))
    a64 = np.asarray(big_a, np.float64)
    b64 = np.asarray(big_b, np.float64)
    assert np.allclose(float(got_log), np.sum(np.log(a64)), rtol=1e-3)
    assert np.allclose(float(got_sq), np.sum((a64 - b64) ** 2), rtol=1e-3)

    print("KERNEL_OK")
</pallas_src>

<mosaic_0001>
module attributes {stable_mosaic.version = 11 : i64} {
  func.func @kernel(%arg0: i32, %arg1: memref<2x128xf32, #tpu.memory_space<vmem>>, %arg2: memref<1x1xf32, #tpu.memory_space<vmem>>, %arg3: memref<2x128xf32, #tpu.memory_space<vmem>>) attributes {dimension_semantics = [#tpu.dimension_semantics<arbitrary>], iteration_bounds = array<i64: 1>, scalar_prefetch = 0 : i64, scratch_operands = 1 : i64, tpu.core_type = #tpu.core_type<tc>, window_params = [{transform_indices = @transform_0, window_bounds = array<i64: 2, 128>}, {pipeline_mode = #tpu.pipeline_mode<synchronous>, transform_indices = @transform_1, window_bounds = array<i64: 1, 1>}]} {
    %c0_i32 = arith.constant 0 : i32
    %0 = arith.cmpi eq, %arg0, %c0_i32 : i32
    %1 = arith.extui %0 : i1 to i32
    %c0_i32_0 = arith.constant 0 : i32
    %2 = arith.cmpi ne, %1, %c0_i32_0 : i32
    scf.if %2 {
      %cst = arith.constant 0.000000e+00 : f32
      %11 = vector.broadcast %cst : f32 to vector<2x128xf32>
      %c0_8 = arith.constant 0 : index
      %c0_9 = arith.constant 0 : index
      %12 = vector.load %arg3[%c0_8, %c0_9] : memref<2x128xf32, #tpu.memory_space<vmem>>, vector<2x128xf32>
      tpu.vector_store %arg3[%c0_8, %c0_9], %11 {strides = array<i32>} : memref<2x128xf32, #tpu.memory_space<vmem>>, vector<2x128xf32>,
    } else {
    }
    %c0 = arith.constant 0 : index
    %c0_1 = arith.constant 0 : index
    %3 = vector.load %arg1[%c0, %c0_1] : memref<2x128xf32, #tpu.memory_space<vmem>>, vector<2x128xf32>
    %4 = math.log %3 : vector<2x128xf32>
    %c0_2 = arith.constant 0 : index
    %c0_3 = arith.constant 0 : index
    %5 = vector.load %arg3[%c0_2, %c0_3] : memref<2x128xf32, #tpu.memory_space<vmem>>, vector<2x128xf32>
    %6 = arith.addf %5, %4 : vector<2x128xf32>
    %c0_4 = arith.constant 0 : index
    %c0_5 = arith.constant 0 : index
    %7 = vector.load %arg3[%c0_4, %c0_5] : memref<2x128xf32, #tpu.memory_space<vmem>>, vector<2x128xf32>
    tpu.vector_store %arg3[%c0_4, %c0_5], %6 {strides = array<i32>} : memref<2x128xf32, #tpu.memory_space<vmem>>, vector<2x128xf32>,
    %c0_i32_6 = arith.constant 0 : i32
    %8 = arith.cmpi eq, %arg0, %c0_i32_6 : i32
    %9 = arith.extui %8 : i1 to i32
    %c0_i32_7 = arith.constant 0 : i32
    %10 = arith.cmpi ne, %9, %c0_i32_7 : i32
    scf.if %10 {
      %c0_8 = arith.constant 0 : index
      %c0_9 = arith.constant 0 : index
      %11 = vector.load %arg3[%c0_8, %c0_9] : memref<2x128xf32, #tpu.memory_space<vmem>>, vector<2x128xf32>
      %12 = vector.shape_cast %11 : vector<2x128xf32> to vector<1x2x128xf32>
      %cst = arith.constant dense<0.000000e+00> : vector<1xf32>
      %13 = vector.multi_reduction <add>, %12, %cst [1, 2] : vector<1x2x128xf32> to vector<1xf32>
      %14 = vector.shape_cast %13 : vector<1xf32> to vector<1x1x1xf32>
      %15 = vector.extract %14[0, 0, 0] : f32 from vector<1x1x1xf32>
      %16 = vector.broadcast %15 : f32 to vector<1x1xf32>
      %c0_10 = arith.constant 0 : index
      %c0_11 = arith.constant 0 : index
      %17 = vector.load %arg2[%c0_10, %c0_11] : memref<1x1xf32, #tpu.memory_space<vmem>>, vector<1x1xf32>
      tpu.vector_store %arg2[%c0_10, %c0_11], %16 {strides = array<i32>} : memref<1x1xf32, #tpu.memory_space<vmem>>, vector<1x1xf32>,
    } else {
    }
    return
  }
  func.func @transform_0(%arg0: i32) -> (i32, i32) {
    %c0_i32 = arith.constant 0 : i32
    %c0_i32_0 = arith.constant 0 : i32
    return %arg0, %c0_i32 : i32, i32
  }
  func.func @transform_1(%arg0: i32) -> (i32, i32) {
    %c0_i32 = arith.constant 0 : i32
    %c0_i32_0 = arith.constant 0 : i32
    %c0_i32_1 = arith.constant 0 : i32
    return %c0_i32, %c0_i32_0 : i32, i32
  }
}

module attributes {stable_mosaic.version = 11 : i64} {
  func.func @kernel(%arg0: i32, %arg1: memref<16x128xf32, #tpu.memory_space<vmem>>, %arg2: memref<16x128xf32, #tpu.memory_space<vmem>>, %arg3: memref<1x1xf32, #tpu.memory_space<vmem>>, %arg4: memref<16x128xf32, #tpu.memory_space<vmem>>) attributes {dimension_semantics = [#tpu.dimension_semantics<arbitrary>], iteration_bounds = array<i64: 1>, scalar_prefetch = 0 : i64, scratch_operands = 1 : i64, tpu.core_type = #tpu.core_type<tc>, window_params = [{transform_indices = @transform_0, window_bounds = array<i64: 16, 128>}, {transform_indices = @transform_1, window_bounds = array<i64: 16, 128>}, {pipeline_mode = #tpu.pipeline_mode<synchronous>, transform_indices = @transform_2, window_bounds = array<i64: 1, 1>}]} {
    %c0_i32 = arith.constant 0 : i32
    %0 = arith.cmpi eq, %arg0, %c0_i32 : i32
    %1 = arith.extui %0 : i1 to i32
    %c0_i32_0 = arith.constant 0 : i32
    %2 = arith.cmpi ne, %1, %c0_i32_0 : i32
    scf.if %2 {
      %cst = arith.constant 0.000000e+00 : f32
      %13 = vector.broadcast %cst : f32 to vector<16x128xf32>
      %c0_10 = arith.constant 0 : index
      %c0_11 = arith.constant 0 : index
      %14 = vector.load %arg4[%c0_10, %c0_11] : memref<16x128xf32, #tpu.memory_space<vmem>>, vector<16x128xf32>
      tpu.vector_store %arg4[%c0_10, %c0_11], %13 {strides = array<i32>} : memref<16x128xf32, #tpu.memory_space<vmem>>, vector<16x128xf32>,
    } else {
    }
    %c0 = arith.constant 0 : index
    %c0_1 = arith.constant 0 : index
    %3 = vector.load %arg1[%c0, %c0_1] : memref<16x128xf32, #tpu.memory_space<vmem>>, vector<16x128xf32>
    %c0_2 = arith.constant 0 : index
    %c0_3 = arith.constant 0 : index
    %4 = vector.load %arg2[%c0_2, %c0_3] : memref<16x128xf32, #tpu.memory_space<vmem>>, vector<16x128xf32>
    %5 = arith.subf %3, %4 : vector<16x128xf32>
    %6 = arith.mulf %5, %5 : vector<16x128xf32>
    %c0_4 = arith.constant 0 : index
    %c0_5 = arith.constant 0 : index
    %7 = vector.load %arg4[%c0_4, %c0_5] : memref<16x128xf32, #tpu.memory_space<vmem>>, vector<16x128xf32>
    %8 = arith.addf %7, %6 : vector<16x128xf32>
    %c0_6 = arith.constant 0 : index
    %c0_7 = arith.constant 0 : index
    %9 = vector.load %arg4[%c0_6, %c0_7] : memref<16x128xf32, #tpu.memory_space<vmem>>, vector<16x128xf32>
    tpu.vector_store %arg4[%c0_6, %c0_7], %8 {strides = array<i32>} : memref<16x128xf32, #tpu.memory_space<vmem>>, vector<16x128xf32>,
    %c0_i32_8 = arith.constant 0 : i32
    %10 = arith.cmpi eq, %arg0, %c0_i32_8 : i32
    %11 = arith.extui %10 : i1 to i32
    %c0_i32_9 = arith.constant 0 : i32
    %12 = arith.cmpi ne, %11, %c0_i32_9 : i32
    scf.if %12 {
      %c0_10 = arith.constant 0 : index
      %c0_11 = arith.constant 0 : index
      %13 = vector.load %arg4[%c0_10, %c0_11] : memref<16x128xf32, #tpu.memory_space<vmem>>, vector<16x128xf32>
      %14 = vector.shape_cast %13 : vector<16x128xf32> to vector<1x16x128xf32>
      %cst = arith.constant dense<0.000000e+00> : vector<1xf32>
      %15 = vector.multi_reduction <add>, %14, %cst [1, 2] : vector<1x16x128xf32> to vector<1xf32>
      %16 = vector.shape_cast %15 : vector<1xf32> to vector<1x1x1xf32>
      %17 = vector.extract %16[0, 0, 0] : f32 from vector<1x1x1xf32>
      %18 = vector.broadcast %17 : f32 to vector<1x1xf32>
      %c0_12 = arith.constant 0 : index
      %c0_13 = arith.constant 0 : index
      %19 = vector.load %arg3[%c0_12, %c0_13] : memref<1x1xf32, #tpu.memory_space<vmem>>, vector<1x1xf32>
      tpu.vector_store %arg3[%c0_12, %c0_13], %18 {strides = array<i32>} : memref<1x1xf32, #tpu.memory_space<vmem>>, vector<1x1xf32>,
    } else {
    }
    return
  }
  func.func @transform_0(%arg0: i32) -> (i32, i32) {
    %c0_i32 = arith.constant 0 : i32
    %c0_i32_0 = arith.constant 0 : i32
    return %arg0, %c0_i32 : i32, i32
  }
  func.func @transform_1(%arg0: i32) -> (i32, i32) {
    %c0_i32 = arith.constant 0 : i32
    %c0_i32_0 = arith.constant 0 : i32
    return %arg0, %c0_i32 : i32, i32
  }
  func.func @transform_2(%arg0: i32) -> (i32, i32) {
    %c0_i32 = arith.constant 0 : i32
    %c0_i32_0 = arith.constant 0 : i32
    %c0_i32_1 = arith.constant 0 : i32
    return %c0_i32, %c0_i32_0 : i32, i32
  }
}

module attributes {stable_mosaic.version = 11 : i64} {
  func.func @kernel(%arg0: i32, %arg1: memref<1x128xf32, #tpu.memory_space<vmem>>, %arg2: memref<1x1xf32, #tpu.memory_space<vmem>>, %arg3: memref<1x128xf32, #tpu.memory_space<vmem>>) attributes {dimension_semantics = [#tpu.dimension_semantics<arbitrary>], iteration_bounds = array<i64: 1>, scalar_prefetch = 0 : i64, scratch_operands = 1 : i64, tpu.core_type = #tpu.core_type<tc>, window_params = [{transform_indices = @transform_0, window_bounds = array<i64: 1, 128>}, {pipeline_mode = #tpu.pipeline_mode<synchronous>, transform_indices = @transform_1, window_bounds = array<i64: 1, 1>}]} {
    %c0_i32 = arith.constant 0 : i32
    %0 = arith.cmpi eq, %arg0, %c0_i32 : i32
    %1 = arith.extui %0 : i1 to i32
    %c0_i32_0 = arith.constant 0 : i32
    %2 = arith.cmpi ne, %1, %c0_i32_0 : i32
    scf.if %2 {
      %cst = arith.constant 0.000000e+00 : f32
      %11 = vector.broadcast %cst : f32 to vector<1x128xf32>
      %c0_8 = arith.constant 0 : index
      %c0_9 = arith.constant 0 : index
      %12 = vector.load %arg3[%c0_8, %c0_9] : memref<1x128xf32, #tpu.memory_space<vmem>>, vector<1x128xf32>
      tpu.vector_store %arg3[%c0_8, %c0_9], %11 {strides = array<i32>} : memref<1x128xf32, #tpu.memory_space<vmem>>, vector<1x128xf32>,
    } else {
    }
    %c0 = arith.constant 0 : index
    %c0_1 = arith.constant 0 : index
    %3 = vector.load %arg1[%c0, %c0_1] : memref<1x128xf32, #tpu.memory_space<vmem>>, vector<1x128xf32>
    %4 = math.log %3 : vector<1x128xf32>
    %c0_2 = arith.constant 0 : index
    %c0_3 = arith.constant 0 : index
    %5 = vector.load %arg3[%c0_2, %c0_3] : memref<1x128xf32, #tpu.memory_space<vmem>>, vector<1x128xf32>
    %6 = arith.addf %5, %4 : vector<1x128xf32>
    %c0_4 = arith.constant 0 : index
    %c0_5 = arith.constant 0 : index
    %7 = vector.load %arg3[%c0_4, %c0_5] : memref<1x128xf32, #tpu.memory_space<vmem>>, vector<1x128xf32>
    tpu.vector_store %arg3[%c0_4, %c0_5], %6 {strides = array<i32>} : memref<1x128xf32, #tpu.memory_space<vmem>>, vector<1x128xf32>,
    %c0_i32_6 = arith.constant 0 : i32
    %8 = arith.cmpi eq, %arg0, %c0_i32_6 : i32
    %9 = arith.extui %8 : i1 to i32
    %c0_i32_7 = arith.constant 0 : i32
    %10 = arith.cmpi ne, %9, %c0_i32_7 : i32
    scf.if %10 {
      %c0_8 = arith.constant 0 : index
      %c0_9 = arith.constant 0 : index
      %11 = vector.load %arg3[%c0_8, %c0_9] : memref<1x128xf32, #tpu.memory_space<vmem>>, vector<1x128xf32>
      %12 = vector.shape_cast %11 : vector<1x128xf32> to vector<1x1x128xf32>
      %cst = arith.constant dense<0.000000e+00> : vector<1xf32>
      %13 = vector.multi_reduction <add>, %12, %cst [1, 2] : vector<1x1x128xf32> to vector<1xf32>
      %14 = vector.shape_cast %13 : vector<1xf32> to vector<1x1x1xf32>
      %15 = vector.extract %14[0, 0, 0] : f32 from vector<1x1x1xf32>
      %16 = vector.broadcast %15 : f32 to vector<1x1xf32>
      %c0_10 = arith.constant 0 : index
      %c0_11 = arith.constant 0 : index
      %17 = vector.load %arg2[%c0_10, %c0_11] : memref<1x1xf32, #tpu.memory_space<vmem>>, vector<1x1xf32>
      tpu.vector_store %arg2[%c0_10, %c0_11], %16 {strides = array<i32>} : memref<1x1xf32, #tpu.memory_space<vmem>>, vector<1x1xf32>,
    } else {
    }
    return
  }
  func.func @transform_0(%arg0: i32) -> (i32, i32) {
    %c0_i32 = arith.constant 0 : i32
    %c0_i32_0 = arith.constant 0 : i32
    return %arg0, %c0_i32 : i32, i32
  }
  func.func @transform_1(%arg0: i32) -> (i32, i32) {
    %c0_i32 = arith.constant 0 : i32
    %c0_i32_0 = arith.constant 0 : i32
    %c0_i32_1 = arith.constant 0 : i32
    return %c0_i32, %c0_i32_0 : i32, i32
  }
}

</mosaic_0001>

<llo_original>
// kernel: rate_distortion_loss.3
$region0: #{rate_distortion_loss.3}
  #allocation0 [shape = 'u32[]', space=smem, size = 0x4, offset = 0x4, fixed_abs, tag = 'smem constant byte address 0x4 - core index']
  #allocation1 [shape = 'u32[144,128]{1,0:T(1,128)}', space=vmem, size = 0x12000, scoped, tag = 'internal scratch']
  #allocation2 [shape = 'f32[2,128]{1,0:T(2,128)}', space=vmem, size = 0x400, scoped, tag = 'scratch operand']
  %s0 = inlined_call_operand.vmem [shape: f32[2,128], index: 0, kind: input, shape index: {}]
  %s1 = inlined_call_operand.hbm [shape: f32[1,1], index: 1, kind: output, shape index: {}]
  %s2 = sld [smem:[#allocation0]]
  $region22: #{rate_distortion_loss.3} parent=0
    _
  %s4 = ssub.s32 1, %s2
  %s5 = scalar_select 0, %s4, %s2
  $region1: #{rate_distortion_loss.3} parent=0
    #allocation3 [shape = 'u8[512]{0}', space=vmem, size = 0x400, scoped, tag = 'output window, operand 0, single buffered']
    #allocation4 [shape = 's32[1]{0}', space=sflag, size = 0x4, scoped, tag = 'scoped memory for rate_distortion_loss.3']
    %6 = vsyncpa [#allocation4], 0
    // Predicated region
    $region2: #{rate_distortion_loss.3} parent=1 // pred_check
      _
    $region3: #{rate_distortion_loss.3} parent=1 // pred_check_branch
      %8 = sbr.rel (0) target = $region5
    $region4: #{rate_distortion_loss.3} parent=1 // pred_region
      _
    $region5: #{rate_distortion_loss.3} parent=1 // pred_fallthru
      _
    %p9 = scmp.eq.s32.totalorder 0, 0
    // Predicated region
    $region6: #{rate_distortion_loss.3} parent=1 // pred_check
      %p10 = pneg %p9
    $region7: #{rate_distortion_loss.3} parent=1 // pred_check_branch
      %12 = sbr.rel (%p10) target = $region9
    $region8: #{rate_distortion_loss.3} parent=1 // pred_region
      %13 = vst [vmem:[#allocation2] sm:$0x3] 0.0
    $region9: #{rate_distortion_loss.3} parent=1 // pred_fallthru
      _
    %v14 = vld [vmem:[%s0] sm:$0x3]
    %v15 = vlog2.pop %v14
    %v16 = vmul.f32 %v15, 0.6931472
    %v17 = vld [vmem:[#allocation2] sm:$0x3]
    %v18 = vadd.f32 %v17, %v16
    %19 = vst [vmem:[#allocation2] sm:$0x3] %v18
    // Predicated region
    $region10: #{rate_distortion_loss.3} parent=1 // pred_check
      %p20 = pneg %p9
    $region11: #{rate_distortion_loss.3} parent=1 // pred_check_branch
      %22 = sbr.rel (%p20) target = $region13
    $region12: #{rate_distortion_loss.3} parent=1 // pred_region
      %v23 = vld [vmem:[#allocation2] sm:$0x3]
      %vm24 = vcmask 1041408
      %v25 = vsel %vm24, %v23, 0.0
      %26 = vadd.xlane.f32.xlu0 %v25
      %v27 = vpop.xlane.xlu0 %26
      %v28 = vrot.slane %v27, 4
      %v29 = vadd.f32 %v27, %v28
      %v30 = vrot.slane %v29, 2
      %v31 = vadd.f32 %v29, %v30
      %v32 = vrot.slane %v31, 1
      %v33 = vadd.f32 %v31, %v32
      %s34 = vtos %v33
      %v35 = vstv %s34
      %vm36 = vcmask 0
      %37 = vst.msk [vmem:[#allocation3] sm:$0x1] %vm36, %v35
    $region13: #{rate_distortion_loss.3} parent=1 // pred_fallthru
      _
    // Predicated region
    $region14: #{rate_distortion_loss.3} parent=1 // pred_check
      _
    $region15: #{rate_distortion_loss.3} parent=1 // pred_check_branch
      %39 = sbr.rel (0) target = $region17
    $region16: #{rate_distortion_loss.3} parent=1 // pred_region
      %s41 = ssub.s32 16, 16
      %42 = vsyncadd [#allocation4], %s41
      %s44 = sshll.u32 [#allocation3], 4
      %s45 = int_to_ptr.vmem [resolvable:$true] %s44
      %47 = dma.vmem_to_hbm [thread:$0]  %s45, 16, %s1, [#allocation4]
    $region17: #{rate_distortion_loss.3} parent=1 // pred_fallthru
      _
    // Predicated region
    $region18: #{rate_distortion_loss.3} parent=1 // pred_check
      _
    $region19: #{rate_distortion_loss.3} parent=1 // pred_check_branch
      %49 = sbr.rel (0) target = $region21
    $region20: #{rate_distortion_loss.3} parent=1 // pred_region
      %50 = dma.done [#allocation4], 16
    $region21: #{rate_distortion_loss.3} parent=1 // pred_fallthru
      _
    %51 = vsyncpa [#allocation4], 1

// kernel: rate_distortion_loss.5
$region0: #{rate_distortion_loss.5}
  #allocation0 [shape = 'u32[]', space=smem, size = 0x4, offset = 0x4, fixed_abs, tag = 'smem constant byte address 0x4 - core index']
  #allocation1 [shape = 'u32[144,128]{1,0:T(1,128)}', space=vmem, size = 0x12000, scoped, tag = 'internal scratch']
  #allocation2 [shape = 'f32[16,128]{1,0:T(8,128)}', space=vmem, size = 0x2000, scoped, tag = 'scratch operand']
  %s0 = inlined_call_operand.vmem [shape: f32[16,128], index: 0, kind: input, shape index: {}]
  %s1 = inlined_call_operand.vmem [shape: f32[16,128], index: 1, kind: input, shape index: {}]
  %s2 = inlined_call_operand.hbm [shape: f32[1,1], index: 2, kind: output, shape index: {}]
  %s3 = sld [smem:[#allocation0]]
  $region26: #{rate_distortion_loss.5} parent=0
    _
  %s5 = ssub.s32 1, %s3
  %s6 = scalar_select 0, %s5, %s3
  $region1: #{rate_distortion_loss.5} parent=0
    #allocation3 [shape = 'u8[512]{0}', space=vmem, size = 0x400, scoped, tag = 'output window, operand 0, single buffered']
    #allocation4 [shape = 's32[1]{0}', space=sflag, size = 0x4, scoped, tag = 'scoped memory for rate_distortion_loss.5']
    %7 = vsyncpa [#allocation4], 0
    // Predicated region
    $region2: #{rate_distortion_loss.5} parent=1 // pred_check
      _
    $region3: #{rate_distortion_loss.5} parent=1 // pred_check_branch
      %9 = sbr.rel (0) target = $region5
    $region4: #{rate_distortion_loss.5} parent=1 // pred_region
      _
    $region5: #{rate_distortion_loss.5} parent=1 // pred_fallthru
      _
    // Predicated region
    $region6: #{rate_distortion_loss.5} parent=1 // pred_check
      _
    $region7: #{rate_distortion_loss.5} parent=1 // pred_check_branch
      %11 = sbr.rel (0) target = $region9
    $region8: #{rate_distortion_loss.5} parent=1 // pred_region
      _
    $region9: #{rate_distortion_loss.5} parent=1 // pred_fallthru
      _
    %p12 = scmp.eq.s32.totalorder 0, 0
    // Predicated region
    $region10: #{rate_distortion_loss.5} parent=1 // pred_check
      %p13 = pneg %p12
    $region11: #{rate_distortion_loss.5} parent=1 // pred_check_branch
      %15 = sbr.rel (%p13) target = $region13
    $region12: #{rate_distortion_loss.5} parent=1 // pred_region
      %16 = vst [vmem:[#allocation2] sm:$0xff] 0.0
      %17 = vst [vmem:[#allocation2 + $0x8] sm:$0xff] 0.0
    $region13: #{rate_distortion_loss.5} parent=1 // pred_fallthru
      _
    %v18 = vld [vmem:[%s0] sm:$0xff]
    %v19 = vld [vmem:[%s0 + $0x8] sm:$0xff]
    %v20 = vld [vmem:[%s1] sm:$0xff]
    %v21 = vld [vmem:[%s1 + $0x8] sm:$0xff]
    %v22 = vsub.f32 %v18, %v20
    %v23 = vsub.f32 %v19, %v21
    %v24 = vmul.f32 %v22, %v22
    %v25 = vmul.f32 %v23, %v23
    %v26 = vld [vmem:[#allocation2] sm:$0xff]
    %v27 = vld [vmem:[#allocation2 + $0x8] sm:$0xff]
    %v28 = vadd.f32 %v26, %v24
    %v29 = vadd.f32 %v27, %v25
    %30 = vst [vmem:[#allocation2] sm:$0xff] %v28
    %31 = vst [vmem:[#allocation2 + $0x8] sm:$0xff] %v29
    // Predicated region
    $region14: #{rate_distortion_loss.5} parent=1 // pred_check
      %p32 = pneg %p12
    $region15: #{rate_distortion_loss.5} parent=1 // pred_check_branch
      %34 = sbr.rel (%p32) target = $region17
    $region16: #{rate_distortion_loss.5} parent=1 // pred_region
      %v35 = vld [vmem:[#allocation2] sm:$0xff]
      %v36 = vld [vmem:[#allocation2 + $0x8] sm:$0xff]
      %v37 = vadd.f32 %v35, %v36
      %38 = vadd.xlane.f32.xlu0 %v37
      %v39 = vpop.xlane.xlu0 %38
      %v40 = vrot.slane %v39, 4
      %v41 = vadd.f32 %v39, %v40
      %v42 = vrot.slane %v41, 2
      %v43 = vadd.f32 %v41, %v42
      %v44 = vrot.slane %v43, 1
      %v45 = vadd.f32 %v43, %v44
      %s46 = vtos %v45
      %v47 = vstv %s46
      %vm48 = vcmask 0
      %49 = vst.msk [vmem:[#allocation3] sm:$0x1] %vm48, %v47
    $region17: #{rate_distortion_loss.5} parent=1 // pred_fallthru
      _
    // Predicated region
    $region18: #{rate_distortion_loss.5} parent=1 // pred_check
      _
    $region19: #{rate_distortion_loss.5} parent=1 // pred_check_branch
      %51 = sbr.rel (0) target = $region21
    $region20: #{rate_distortion_loss.5} parent=1 // pred_region
      %s53 = ssub.s32 16, 16
      %54 = vsyncadd [#allocation4], %s53
      %s56 = sshll.u32 [#allocation3], 4
      %s57 = int_to_ptr.vmem [resolvable:$true] %s56
      %59 = dma.vmem_to_hbm [thread:$0]  %s57, 16, %s2, [#allocation4]
    $region21: #{rate_distortion_loss.5} parent=1 // pred_fallthru
      _
    // Predicated region
    $region22: #{rate_distortion_loss.5} parent=1 // pred_check
      _
    $region23: #{rate_distortion_loss.5} parent=1 // pred_check_branch
      %61 = sbr.rel (0) target = $region25
    $region24: #{rate_distortion_loss.5} parent=1 // pred_region
      %62 = dma.done [#allocation4], 16
    $region25: #{rate_distortion_loss.5} parent=1 // pred_fallthru
      _
    %63 = vsyncpa [#allocation4], 1

// kernel: rate_distortion_loss.4
$region0: #{rate_distortion_loss.4}
  #allocation0 [shape = 'u32[]', space=smem, size = 0x4, offset = 0x4, fixed_abs, tag = 'smem constant byte address 0x4 - core index']
  #allocation1 [shape = 'u32[144,128]{1,0:T(1,128)}', space=vmem, size = 0x12000, scoped, tag = 'internal scratch']
  #allocation2 [shape = 'f32[1,128]{1,0:T(1,128)}', space=vmem, size = 0x200, scoped, tag = 'scratch operand']
  %s0 = inlined_call_operand.vmem [shape: f32[1,128], index: 0, kind: input, shape index: {}]
  %s1 = inlined_call_operand.hbm [shape: f32[1,1], index: 1, kind: output, shape index: {}]
  %s2 = sld [smem:[#allocation0]]
  $region22: #{rate_distortion_loss.4} parent=0
    _
  %s4 = ssub.s32 1, %s2
  %s5 = scalar_select 0, %s4, %s2
  $region1: #{rate_distortion_loss.4} parent=0
    #allocation3 [shape = 'u8[512]{0}', space=vmem, size = 0x400, scoped, tag = 'output window, operand 0, single buffered']
    #allocation4 [shape = 's32[1]{0}', space=sflag, size = 0x4, scoped, tag = 'scoped memory for rate_distortion_loss.4']
    %6 = vsyncpa [#allocation4], 0
    // Predicated region
    $region2: #{rate_distortion_loss.4} parent=1 // pred_check
      _
    $region3: #{rate_distortion_loss.4} parent=1 // pred_check_branch
      %8 = sbr.rel (0) target = $region5
    $region4: #{rate_distortion_loss.4} parent=1 // pred_region
      _
    $region5: #{rate_distortion_loss.4} parent=1 // pred_fallthru
      _
    %p9 = scmp.eq.s32.totalorder 0, 0
    // Predicated region
    $region6: #{rate_distortion_loss.4} parent=1 // pred_check
      %p10 = pneg %p9
    $region7: #{rate_distortion_loss.4} parent=1 // pred_check_branch
      %12 = sbr.rel (%p10) target = $region9
    $region8: #{rate_distortion_loss.4} parent=1 // pred_region
      %13 = vst [vmem:[#allocation2] sm:$0x1] 0.0
    $region9: #{rate_distortion_loss.4} parent=1 // pred_fallthru
      _
    %v14 = vld [vmem:[%s0] sm:$0x1]
    %v15 = vlog2.pop %v14
    %v16 = vmul.f32 %v15, 0.6931472
    %v17 = vld [vmem:[#allocation2] sm:$0x1]
    %v18 = vadd.f32 %v17, %v16
    %19 = vst [vmem:[#allocation2] sm:$0x1] %v18
    // Predicated region
    $region10: #{rate_distortion_loss.4} parent=1 // pred_check
      %p20 = pneg %p9
    $region11: #{rate_distortion_loss.4} parent=1 // pred_check_branch
      %22 = sbr.rel (%p20) target = $region13
    $region12: #{rate_distortion_loss.4} parent=1 // pred_region
      %v23 = vld [vmem:[#allocation2] sm:$0x1]
      %vm24 = vcmask 1040384
      %v25 = vsel %vm24, %v23, 0.0
      %26 = vadd.xlane.f32.xlu0 %v25
      %v27 = vpop.xlane.xlu0 %26
      %v28 = vrot.slane %v27, 4
      %v29 = vadd.f32 %v27, %v28
      %v30 = vrot.slane %v29, 2
      %v31 = vadd.f32 %v29, %v30
      %v32 = vrot.slane %v31, 1
      %v33 = vadd.f32 %v31, %v32
      %s34 = vtos %v33
      %v35 = vstv %s34
      %vm36 = vcmask 0
      %37 = vst.msk [vmem:[#allocation3] sm:$0x1] %vm36, %v35
    $region13: #{rate_distortion_loss.4} parent=1 // pred_fallthru
      _
    // Predicated region
    $region14: #{rate_distortion_loss.4} parent=1 // pred_check
      _
    $region15: #{rate_distortion_loss.4} parent=1 // pred_check_branch
      %39 = sbr.rel (0) target = $region17
    $region16: #{rate_distortion_loss.4} parent=1 // pred_region
      %s41 = ssub.s32 16, 16
      %42 = vsyncadd [#allocation4], %s41
      %s44 = sshll.u32 [#allocation3], 4
      %s45 = int_to_ptr.vmem [resolvable:$true] %s44
      %47 = dma.vmem_to_hbm [thread:$0]  %s45, 16, %s1, [#allocation4]
    $region17: #{rate_distortion_loss.4} parent=1 // pred_fallthru
      _
    // Predicated region
    $region18: #{rate_distortion_loss.4} parent=1 // pred_check
      _
    $region19: #{rate_distortion_loss.4} parent=1 // pred_check_branch
      %49 = sbr.rel (0) target = $region21
    $region20: #{rate_distortion_loss.4} parent=1 // pred_region
      %50 = dma.done [#allocation4], 16
    $region21: #{rate_distortion_loss.4} parent=1 // pred_fallthru
      _
    %51 = vsyncpa [#allocation4], 1

</llo_original>
